<compile_context>
chip_gen: v7x
topology: tpu7x:2x2x1
jax: 0.10.0
libtpu: 0.0.40
codegen_flags: <defaults>
</compile_context>

<pallas_src>
import functools
import math
from collections import OrderedDict

import jax
import jax.numpy as jnp
from jax import lax
from jax.experimental import pallas as pl
from jax.experimental.pallas import tpu as pltpu


# ----------------------------- Pallas kernels -----------------------------

def _conv1x1_kernel(x_ref, w_ref, b_ref, o_ref):
    # x: (Cin, P)  w: (Cout, Cin)  b: (Cout, 1)  ->  o: (Cout, P)   (lane-dense)
    acc = jnp.dot(w_ref[...], x_ref[...], preferred_element_type=jnp.float32)
    o_ref[...] = (acc + b_ref[...]).astype(o_ref.dtype)


def _conv1x1_add_kernel(x_ref, w_ref, b_ref, td_ref, o_ref):
    # Fused FPN merge: lateral 1x1 conv + bias + top-down add in one pass.
    acc = jnp.dot(w_ref[...], x_ref[...], preferred_element_type=jnp.float32)
    o_ref[...] = (acc + b_ref[...] + td_ref[...]).astype(o_ref.dtype)


def _conv3x3_kernel(x_ref, w_ref, b_ref, o_ref, *, tap_offsets, q):
    # x: (C, Pp) zero-padded + spatially-flattened input
    # w: (27, Cout, C) one (Cout, C) matrix per tap, b: (Cout, 1)
    # o: (Cout, Q) outputs in padded-(H,W) row-major layout.
    # Fused im2col: each tap is just a shifted lane window of x — no 27x HBM blowup.
    acc = jnp.dot(w_ref[0], x_ref[:, pl.ds(tap_offsets[0], q)],
                  preferred_element_type=jnp.float32)
    for t in range(1, 27):
        acc = acc + jnp.dot(w_ref[t], x_ref[:, pl.ds(tap_offsets[t], q)],
                            preferred_element_type=jnp.float32)
    o_ref[...] = (acc + b_ref[...]).astype(o_ref.dtype)


# ------------------------- conv wrappers (thin glue) -------------------------

def conv1x1_ncp(x, w_torch, b, top_down=None):
    """1x1x1 Conv3d (+ optional fused top-down add).

    x: (N, Cin, D, H, W);  w_torch: (Cout, Cin, 1, 1, 1);  top_down: (N, Cout, P) or None.
    Returns (N, Cout, P) with P = D*H*W (flat spatial, lane axis).
    """
    N, Cin = x.shape[:2]
    P = math.prod(x.shape[2:])
    xf = x.reshape(N, Cin, P)                 # free reshape (contiguous)
    Cout = w_torch.shape[0]
    w2 = w_torch[:, :, 0, 0, 0]               # (Cout, Cin)
    b2 = b.reshape(Cout, 1)

    x_spec = pl.BlockSpec((None, Cin, P), lambda n: (n, 0, 0))
    w_spec = pl.BlockSpec((Cout, Cin), lambda n: (0, 0))
    b_spec = pl.BlockSpec((Cout, 1), lambda n: (0, 0))
    o_spec = pl.BlockSpec((None, Cout, P), lambda n: (n, 0, 0))

    if top_down is None:
        kern, in_specs, args = _conv1x1_kernel, [x_spec, w_spec, b_spec], (xf, w2, b2)
    else:
        td_spec = pl.BlockSpec((None, Cout, P), lambda n: (n, 0, 0))
        kern = _conv1x1_add_kernel
        in_specs = [x_spec, w_spec, b_spec, td_spec]
        args = (xf, w2, b2, top_down)

    return pl.pallas_call(
        kern,
        out_shape=jax.ShapeDtypeStruct((N, Cout, P), jnp.float32),
        grid=(N,),
        in_specs=in_specs,
        out_specs=o_spec,
        compiler_params=pltpu.CompilerParams(dimension_semantics=("parallel",)),
    )(*args)


def conv3x3_ncp(x_flat, dhw, w_torch, b):
    """3x3x3 Conv3d, padding=1.  x_flat: (N, C, D*H*W) -> (N, Cout, D, H, W)."""
    N, C, _ = x_flat.shape
    D, H, W = dhw
    Cout = w_torch.shape[0]
    Hp, Wp = H + 2, W + 2
    Dp = D + 3                      # one extra trailing depth slab keeps all tap windows in-bounds
    Pp = Dp * Hp * Wp
    Q = D * Hp * Wp                 # output carried in padded-(H,W) row-major layout

    # Single zero-pad pass (halo), then a free flatten of the spatial dims.
    xp = jnp.pad(x_flat.reshape(N, C, D, H, W),
                 ((0, 0), (0, 0), (1, 2), (1, 1), (1, 1)))
    xpf = xp.reshape(N, C, Pp)

    wt = jnp.transpose(w_torch, (2, 3, 4, 0, 1)).reshape(27, Cout, C)   # (tap, Cout, C)
    b2 = b.reshape(Cout, 1)
    # Output flat index j = d*Hp*Wp + h*Wp + w reads input flat index j + tap_offset.
    tap_offsets = tuple(kd * Hp * Wp + kh * Wp + kw
                        for kd in range(3) for kh in range(3) for kw in range(3))

    out = pl.pallas_call(
        functools.partial(_conv3x3_kernel, tap_offsets=tap_offsets, q=Q),
        out_shape=jax.ShapeDtypeStruct((N, Cout, Q), jnp.float32),
        grid=(N,),
        in_specs=[
            pl.BlockSpec((None, C, Pp), lambda n: (n, 0, 0)),
            pl.BlockSpec((27, Cout, C), lambda n: (0, 0, 0)),
            pl.BlockSpec((Cout, 1), lambda n: (0, 0)),
        ],
        out_specs=pl.BlockSpec((None, Cout, Q), lambda n: (n, 0, 0)),
        compiler_params=pltpu.CompilerParams(dimension_semantics=("parallel",)),
    )(xpf, wt, b2)
    # TODO(synk): for very large levels the (C, Pp) block should be tiled along the
    # flat spatial axis with a halo and an explicit vmem_limit_bytes (v7x 64 MiB).
    # Valid outputs live at j = d*Hp*Wp + h*Wp + w; strip the halo columns.
    return out.reshape(N, Cout, D, Hp, Wp)[:, :, :, :H, :W]


# ------------------------- nearest-exact interpolation -------------------------

def _nearest_exact_idx(in_size, out_size):
    idx = jnp.floor((jnp.arange(out_size) + 0.5) * in_size / out_size).astype(jnp.int32)
    return jnp.clip(idx, 0, in_size - 1)


def _flat_resize_idx(src_dhw, dst_dhw):
    """Flat gather indices mapping dst (D,H,W) positions to src flat spatial indices."""
    Ds, Hs, Ws = src_dhw
    Dt, Ht, Wt = dst_dhw
    idd = _nearest_exact_idx(Ds, Dt)
    idh = _nearest_exact_idx(Hs, Ht)
    idw = _nearest_exact_idx(Ws, Wt)
    return (idd[:, None, None] * (Hs * Ws)
            + idh[None, :, None] * Ws
            + idw[None, None, :]).reshape(-1)


# ------------------------------ FPN module ------------------------------

class FeaturePyramidNetworkPallas:
    """FeaturePyramidNetwork with Conv3d inner/layer blocks (norm=None, act=None)."""

    def __init__(self, in_channels_list, out_channels, key):
        self.params = {"inner_w": [], "inner_b": [], "layer_w": [], "layer_b": []}
        for cin in in_channels_list:
            key, k1, k2, k3, k4 = jax.random.split(key, 5)
            # deterministic synthetic init (kaiming-uniform-like bounds)
            b1 = (3.0 / cin) ** 0.5
            self.params["inner_w"].append(
                jax.random.uniform(k1, (out_channels, cin, 1, 1, 1), jnp.float32, -b1, b1))
            self.params["inner_b"].append(
                jax.random.uniform(k2, (out_channels,), jnp.float32, -0.1, 0.1))
            b3 = (3.0 / (out_channels * 27)) ** 0.5
            self.params["layer_w"].append(
                jax.random.uniform(k3, (out_channels, out_channels, 3, 3, 3), jnp.float32, -b3, b3))
            self.params["layer_b"].append(
                jax.random.uniform(k4, (out_channels,), jnp.float32, -0.1, 0.1))
        # TODO(synk): extra_blocks / norm_layer paths not exercised (module defaults = None).

    def __call__(self, x):
        names = list(x.keys())
        feats = list(x.values())                       # NCDHW, layout kept as-is
        p = self.params

        last_dhw = feats[-1].shape[2:]
        last_inner = conv1x1_ncp(feats[-1], p["inner_w"][-1], p["inner_b"][-1])   # (N, C, P) flat
        results = [conv3x3_ncp(last_inner, last_dhw, p["layer_w"][-1], p["layer_b"][-1])]

        for idx in range(len(feats) - 2, -1, -1):
            dhw = feats[idx].shape[2:]
            # nearest-exact top-down resize as a flat gather on the small source level
            # TODO(synk): gather could be fused into the conv kernel via scalar prefetch.
            flat_idx = _flat_resize_idx(last_dhw, dhw)
            top_down = jnp.take(last_inner, flat_idx, axis=2)          # (N, Cout, P_dst)
            # fused: lateral 1x1 conv + bias + top-down add in one kernel
            last_inner = conv1x1_ncp(feats[idx], p["inner_w"][idx], p["inner_b"][idx],
                                     top_down=top_down)
            last_dhw = dhw
            results.insert(0, conv3x3_ncp(last_inner, dhw,
                                          p["layer_w"][idx], p["layer_b"][idx]))

        return OrderedDict(zip(names, results))


# ------------------------------ pure-JAX reference ------------------------------

def _conv3d_ref(x, w, b, padding):
    y = lax.conv_general_dilated(
        x, w, (1, 1, 1), [(padding, padding)] * 3,
        dimension_numbers=("NCDHW", "OIDHW", "NCDHW"))
    return y + b.reshape(1, -1, 1, 1, 1)


def _resize_ref(x, out_dhw):
    _, _, D, H, W = x.shape
    Do, Ho, Wo = out_dhw
    x = jnp.take(x, _nearest_exact_idx(D, Do), axis=2)
    x = jnp.take(x, _nearest_exact_idx(H, Ho), axis=3)
    x = jnp.take(x, _nearest_exact_idx(W, Wo), axis=4)
    return x


def fpn_ref(x, p):
    names = list(x.keys())
    feats = list(x.values())
    last_inner = _conv3d_ref(feats[-1], p["inner_w"][-1], p["inner_b"][-1], 0)
    results = [_conv3d_ref(last_inner, p["layer_w"][-1], p["layer_b"][-1], 1)]
    for idx in range(len(feats) - 2, -1, -1):
        inner_lateral = _conv3d_ref(feats[idx], p["inner_w"][idx], p["inner_b"][idx], 0)
        top_down = _resize_ref(last_inner, inner_lateral.shape[-3:])
        last_inner = inner_lateral + top_down
        results.insert(0, _conv3d_ref(last_inner, p["layer_w"][idx], p["layer_b"][idx], 1))
    return OrderedDict(zip(names, results))


# ------------------------------------ main ------------------------------------

if __name__ == "__main__":
    key = jax.random.PRNGKey(0)
    k0, k1, kp = jax.random.split(key, 3)

    # Two pyramid levels (highest resolution first), NCDHW.
    x = OrderedDict()
    x["p2"] = jax.random.normal(k0, (2, 4, 4, 8, 8), jnp.float32)   # (N, C=4, D=4, H=8, W=8)
    x["p3"] = jax.random.normal(k1, (2, 8, 2, 4, 4), jnp.float32)   # (N, C=8, D=2, H=4, W=4)

    fpn = FeaturePyramidNetworkPallas(in_channels_list=[4, 8], out_channels=8, key=kp)

    out = fpn(x)
    out = jax.tree_util.tree_map(jax.block_until_ready, out)

    ref = fpn_ref(x, fpn.params)
    for k in out:
        assert out[k].shape == ref[k].shape, (k, out[k].shape, ref[k].shape)
        assert jnp.allclose(out[k], ref[k], atol=1e-4, rtol=1e-4), f"mismatch at {k}"

    print("KERNEL_OK")
</pallas_src>

<mosaic_0001>
module attributes {stable_mosaic.version = 11 : i64} {
  func.func @_conv1x1_kernel(%arg0: i32, %arg1: memref<1x8x32xf32, #tpu.memory_space<vmem>>, %arg2: memref<8x8xf32, #tpu.memory_space<vmem>>, %arg3: memref<8x1xf32, #tpu.memory_space<vmem>>, %arg4: memref<1x8x32xf32, #tpu.memory_space<vmem>>) attributes {dimension_semantics = [#tpu.dimension_semantics<parallel>], iteration_bounds = array<i64: 2>, scalar_prefetch = 0 : i64, scratch_operands = 0 : i64, tpu.core_type = #tpu.core_type<tc>, window_params = [{transform_indices = @transform_0, window_bounds = array<i64: 1, 8, 32>}, {pipeline_mode = #tpu.pipeline_mode<synchronous>, transform_indices = @transform_1, window_bounds = array<i64: 8, 8>}, {pipeline_mode = #tpu.pipeline_mode<synchronous>, transform_indices = @transform_2, window_bounds = array<i64: 8, 1>}, {transform_indices = @transform_3, window_bounds = array<i64: 1, 8, 32>}]} {
    %c0 = arith.constant 0 : index
    %c0_0 = arith.constant 0 : index
    %0 = vector.load %arg2[%c0, %c0_0] : memref<8x8xf32, #tpu.memory_space<vmem>>, vector<8x8xf32>
    %c0_1 = arith.constant 0 : index
    %c0_2 = arith.constant 0 : index
    %c0_3 = arith.constant 0 : index
    %1 = vector.load %arg1[%c0_1, %c0_2, %c0_3] : memref<1x8x32xf32, #tpu.memory_space<vmem>>, vector<1x8x32xf32>
    %2 = vector.shape_cast %1 : vector<1x8x32xf32> to vector<8x32xf32>
    %cst = arith.constant dense<0.000000e+00> : vector<8x32xf32>
    %3 = tpu.matmul %0, %2, %cst {dimension_numbers = #tpu.dot_dimension_numbers<[1], [0], [0], [1], [0, 0, 1, 1], [], []>} : vector<8x8xf32>, vector<8x32xf32>, vector<8x32xf32> -> vector<8x32xf32>
    %c0_4 = arith.constant 0 : index
    %c0_5 = arith.constant 0 : index
    %4 = vector.load %arg3[%c0_4, %c0_5] : memref<8x1xf32, #tpu.memory_space<vmem>>, vector<8x1xf32>
    %5 = vector.broadcast %4 : vector<8x1xf32> to vector<8x32xf32>
    %6 = arith.addf %3, %5 : vector<8x32xf32>
    %c0_6 = arith.constant 0 : index
    %c0_7 = arith.constant 0 : index
    %c0_8 = arith.constant 0 : index
    %7 = vector.load %arg4[%c0_6, %c0_7, %c0_8] : memref<1x8x32xf32, #tpu.memory_space<vmem>>, vector<1x8x32xf32>
    %8 = vector.shape_cast %7 : vector<1x8x32xf32> to vector<8x32xf32>
    %9 = vector.shape_cast %6 : vector<8x32xf32> to vector<1x8x32xf32>
    tpu.vector_store %arg4[%c0_6, %c0_7, %c0_8], %9 {strides = array<i32>} : memref<1x8x32xf32, #tpu.memory_space<vmem>>, vector<1x8x32xf32>,
    return
  }
  func.func @transform_0(%arg0: i32) -> (i32, i32, i32) {
    %c0_i32 = arith.constant 0 : i32
    %c0_i32_0 = arith.constant 0 : i32
    %c0_i32_1 = arith.constant 0 : i32
    return %arg0, %c0_i32, %c0_i32_0 : i32, i32, i32
  }
  func.func @transform_1(%arg0: i32) -> (i32, i32) {
    %c0_i32 = arith.constant 0 : i32
    %c0_i32_0 = arith.constant 0 : i32
    %c0_i32_1 = arith.constant 0 : i32
    return %c0_i32, %c0_i32_0 : i32, i32
  }
  func.func @transform_2(%arg0: i32) -> (i32, i32) {
    %c0_i32 = arith.constant 0 : i32
    %c0_i32_0 = arith.constant 0 : i32
    %c0_i32_1 = arith.constant 0 : i32
    return %c0_i32, %c0_i32_0 : i32, i32
  }
  func.func @transform_3(%arg0: i32) -> (i32, i32, i32) {
    %c0_i32 = arith.constant 0 : i32
    %c0_i32_0 = arith.constant 0 : i32
    %c0_i32_1 = arith.constant 0 : i32
    return %arg0, %c0_i32, %c0_i32_0 : i32, i32, i32
  }
}

</mosaic_0001>

<llo_original>
// kernel: tpu_custom_call.1
$region0: #{tpu_custom_call.1}
  #allocation0 [shape = 'u32[]', space=smem, size = 0x4, offset = 0x4, fixed_abs, tag = 'smem constant byte address 0x4 - core index']
  #allocation1 [shape = 'u32[144,128]{1,0:T(1,128)}', space=vmem, size = 0x12000, scoped, tag = 'internal scratch']
  %s0 = inlined_call_operand.hbm [shape: f32[2,8,32], index: 0, kind: input, shape index: {}]
  %s1 = inlined_call_operand.vmem [shape: f32[8,8], index: 1, kind: input, shape index: {}]
  %s2 = inlined_call_operand.vmem [shape: f32[8,1], index: 2, kind: input, shape index: {}]
  %s3 = inlined_call_operand.hbm [shape: f32[2,8,32], index: 3, kind: output, shape index: {}]
  %s4 = sld [smem:[#allocation0]]
  $region49: #{tpu_custom_call.1} parent=0
    _
  %s6 = ssub.s32 1, %s4
  %s7 = scalar_select 0, %s6, %s4
  $region1: #{tpu_custom_call.1} parent=0
    #allocation2 [shape = 'u8[8192]{0}', space=vmem, size = 0x2000, scoped, tag = 'input window, operand 0']
    #allocation3 [shape = 's32[2]{0}', space=sflag, size = 0x8, scoped, tag = 'scoped memory for tpu_custom_call.1']
    #allocation4 [shape = 's32[2]{0}', space=sflag, size = 0x8, scoped, tag = 'scoped memory for tpu_custom_call.1']
    #allocation5 [shape = 'u8[8192]{0}', space=vmem, size = 0x2000, scoped, tag = 'output window, operand 0']
    %8 = vsyncpa [#allocation3], 0
    %s9 = scalar_lea.sflag [#allocation3], 1
    %10 = vsyncpa %s9, 0
    %11 = vsyncpa [#allocation4], 0
    %s12 = scalar_lea.sflag [#allocation4], 1
    %13 = vsyncpa %s12, 0
    loop: start=0, step=1, limit=4
    $region2: #{tpu_custom_call.1} parent=1 // loop_pre_header
      _
    $region3: #{tpu_custom_call.1} parent=1 // loop_header
      %s15 = sphi 0, %s19
      %p16 = scmp.ge.s32.totalorder %s15, 4
      %s25 = sphi 0, %s27
      %s28 = sphi 0, %s25
      %s29 = sphi 0, %s28
      %s45 = sphi 0, %s29
      %s49 = sphi 0, %s49
      %s51 = sphi 0, %s49
      %s52 = sphi 0, %s51
      %s66 = sphi 0, %s52
      %s70 = sphi 0, %s70
      %s72 = sphi 0, %s70
      %s73 = sphi 0, %s72
      %s87 = sphi 0, %s73
      %s93 = sphi 0, %s95
      %s96 = sphi 0, %s93
      %s97 = sphi 0, %s96
      %s113 = sphi 0, %s97
    $region4: #{tpu_custom_call.1} parent=1 // loop_header_branch
      %18 = sbr.rel (%p16) target = $region8
    $region5: #{tpu_custom_call.1} parent=1 // loop_body
      %s20 = ssub.s32 %s15, 1
      %s21 = ssub.s32 %s15, 2
      %s22 = sadd.s32 %s15, 1
      %s23 = ssub.s32 %s15, %s22
      %p24 = scmp.eq.s32.totalorder %s23, 0
      %s26 = sadd.s32 %s25, 1
      %s27 = scalar_select %p24, %s25, %s26
      %p30 = pneg %p24
      %p31 = scmp.eq.s32.totalorder %s15, 1
      %p32 = por %p30, %p31
      %p33 = scmp.ne.s32.totalorder %s25, %s28
      %p34 = scmp.eq.s32.totalorder %s15, 0
      %p35 = por %p33, %p34
      %p36 = scmp.ne.s32.totalorder %s25, %s28
      %p37 = scmp.eq.s32.totalorder %s20, 1
      %p38 = por %p36, %p37
      %p39 = scmp.ne.s32.totalorder %s28, %s29
      %p40 = scmp.eq.s32.totalorder %s20, 0
      %p41 = por %p39, %p40
      %p42 = scmp.ne.s32.totalorder %s28, %s29
      %p43 = scmp.eq.s32.totalorder %s21, 1
      %p44 = por %p42, %p43
      %p46 = scmp.ne.s32.totalorder %s29, %s45
      %p47 = scmp.eq.s32.totalorder %s21, 0
      %p48 = por %p46, %p47
      %s50 = sadd.s32 %s49, 1
      %p53 = scmp.eq.s32.totalorder %s15, 1
      %p54 = scmp.ne.s32.totalorder %s49, %s51
      %p55 = scmp.eq.s32.totalorder %s15, 0
      %p56 = por %p54, %p55
      %p57 = scmp.ne.s32.totalorder %s49, %s51
      %p58 = scmp.eq.s32.totalorder %s20, 1
      %p59 = por %p57, %p58
      %p60 = scmp.ne.s32.totalorder %s51, %s52
      %p61 = scmp.eq.s32.totalorder %s20, 0
      %p62 = por %p60, %p61
      %p63 = scmp.ne.s32.totalorder %s51, %s52
      %p64 = scmp.eq.s32.totalorder %s21, 1
      %p65 = por %p63, %p64
      %p67 = scmp.ne.s32.totalorder %s52, %s66
      %p68 = scmp.eq.s32.totalorder %s21, 0
      %p69 = por %p67, %p68
      %s71 = sadd.s32 %s70, 1
      %p74 = scmp.eq.s32.totalorder %s15, 1
      %p75 = scmp.ne.s32.totalorder %s70, %s72
      %p76 = scmp.eq.s32.totalorder %s15, 0
      %p77 = por %p75, %p76
      %p78 = scmp.ne.s32.totalorder %s70, %s72
      %p79 = scmp.eq.s32.totalorder %s20, 1
      %p80 = por %p78, %p79
      %p81 = scmp.ne.s32.totalorder %s72, %s73
      %p82 = scmp.eq.s32.totalorder %s20, 0
      %p83 = por %p81, %p82
      %p84 = scmp.ne.s32.totalorder %s72, %s73
      %p85 = scmp.eq.s32.totalorder %s21, 1
      %p86 = por %p84, %p85
      %p88 = scmp.ne.s32.totalorder %s73, %s87
      %p89 = scmp.eq.s32.totalorder %s21, 0
      %p90 = por %p88, %p89
      %s91 = ssub.s32 %s15, %s22
      %p92 = scmp.eq.s32.totalorder %s91, 0
      %s94 = sadd.s32 %s93, 1
      %s95 = scalar_select %p92, %s93, %s94
      %p98 = pneg %p92
      %p99 = scmp.eq.s32.totalorder %s15, 1
      %p100 = por %p98, %p99
      %p101 = scmp.ne.s32.totalorder %s93, %s96
      %p102 = scmp.eq.s32.totalorder %s15, 0
      %p103 = por %p101, %p102
      %p104 = scmp.ne.s32.totalorder %s93, %s96
      %p105 = scmp.eq.s32.totalorder %s20, 1
      %p106 = por %p104, %p105
      %p107 = scmp.ne.s32.totalorder %s96, %s97
      %p108 = scmp.eq.s32.totalorder %s20, 0
      %p109 = por %p107, %p108
      %p110 = scmp.ne.s32.totalorder %s96, %s97
      %p111 = scmp.eq.s32.totalorder %s21, 1
      %p112 = por %p110, %p111
      %p114 = scmp.ne.s32.totalorder %s97, %s113
      %p115 = scmp.eq.s32.totalorder %s21, 0
      %p116 = por %p114, %p115
      %p117 = scmp.le.s32.totalorder 1, %s15
      %p118 = scmp.lt.s32.totalorder %s15, 3
      %p119 = pnand %p117, %p118
      %p120 = pneg %p119
      // Predicated region
      $region9: #{tpu_custom_call.1} parent=5 // pred_check
        _
      $region10: #{tpu_custom_call.1} parent=5 // pred_check_branch
        %122 = sbr.rel (%p119) target = $region12
      $region11: #{tpu_custom_call.1} parent=5 // pred_region
        %s123 = ssub.s32 %s15, 1
        // Predicated region
        $region13: #{tpu_custom_call.1} parent=11 // pred_check
          %p124 = pneg %p62
        $region14: #{tpu_custom_call.1} parent=11 // pred_check_branch
          %126 = sbr.rel (%p124) target = $region16
        $region15: #{tpu_custom_call.1} parent=11 // pred_region
          _
        $region16: #{tpu_custom_call.1} parent=11 // pred_fallthru
          _
        // Predicated region
        $region17: #{tpu_custom_call.1} parent=11 // pred_check
          %p127 = pneg %p83
        $region18: #{tpu_custom_call.1} parent=11 // pred_check_branch
          %129 = sbr.rel (%p127) target = $region20
        $region19: #{tpu_custom_call.1} parent=11 // pred_region
          _
        $region20: #{tpu_custom_call.1} parent=11 // pred_fallthru
          _
      $region12: #{tpu_custom_call.1} parent=5 // pred_fallthru
        _
      %p130 = scmp.lt.s32.totalorder %s15, 2
      // Predicated region
      $region21: #{tpu_custom_call.1} parent=5 // pred_check
        %p131 = pneg %p130
      $region22: #{tpu_custom_call.1} parent=5 // pred_check_branch
        %133 = sbr.rel (%p131) target = $region24
      $region23: #{tpu_custom_call.1} parent=5 // pred_region
        // Predicated region
        $region25: #{tpu_custom_call.1} parent=23 // pred_check
          %p134 = pneg %p35
        $region26: #{tpu_custom_call.1} parent=23 // pred_check_branch
          %136 = sbr.rel (%p134) target = $region28
        $region27: #{tpu_custom_call.1} parent=23 // pred_region
          %s137 = sand.u32 %s25, 1
          %s138 = scalar_lea.sflag [#allocation3], %s137
          %s139 = sand.u32 %s25, 1
          %s140 = smul.addr %s139, 8
          %s141 = scalar_lea.vmem [#allocation2], %s140
          %s143 = ssub.s32 128, 128
          %144 = vsyncadd %s138, %s143
          %s145 = smul.addr %s15, 128
          %s146 = scalar_lea.hbm %s0, %s145
          %s148 = sshll.u32 %s141, 4
          %s149 = int_to_ptr.vmem [resolvable:$true] %s148
          %151 = dma.hbm_to_vmem [thread:$0]  %s146, 128, %s149, %s138
        $region28: #{tpu_custom_call.1} parent=23 // pred_fallthru
          _
      $region24: #{tpu_custom_call.1} parent=5 // pred_fallthru
        _
      %p152 = scmp.le.s32.totalorder 1, %s15
      %p153 = scmp.lt.s32.totalorder %s15, 3
      %p154 = pnand %p152, %p153
      %p155 = pneg %p154
      // Predicated region
      $region29: #{tpu_custom_call.1} parent=5 // pred_check
        _
      $region30: #{tpu_custom_call.1} parent=5 // pred_check_branch
        %157 = sbr.rel (%p154) target = $region32
      $region31: #{tpu_custom_call.1} parent=5 // pred_region
        %s158 = ssub.s32 %s15, 1
        %s159 = sand.u32 %s28, 1
        %s160 = scalar_lea.sflag [#allocation3], %s159
        %s161 = sand.u32 %s28, 1
        %s162 = smul.addr %s161, 8
        %s163 = scalar_lea.vmem [#allocation2], %s162
        // Predicated region
        $region33: #{tpu_custom_call.1} parent=31 // pred_check
          %p164 = pneg %p41
        $region34: #{tpu_custom_call.1} parent=31 // pred_check_branch
          %166 = sbr.rel (%p164) target = $region36
        $region35: #{tpu_custom_call.1} parent=31 // pred_region
          %167 = dma.done %s160, 128
        $region36: #{tpu_custom_call.1} parent=31 // pred_fallthru
          _
        %s168 = sand.u32 %s28, 1
        %s169 = scalar_lea.sflag [#allocation3], %s168
        %s170 = sand.u32 %s28, 1
        %s171 = smul.addr %s170, 8
        %s172 = scalar_lea.vmem [#allocation2], %s171
        %p173 = pneg %p41
        %p174 = pneg %p38
        %p175 = pneg %p62
        %p176 = pneg %p59
        %p177 = pneg %p83
        %p178 = pneg %p80
        %p179 = pneg %p109
        %p180 = pneg %p106
        %s181 = sand.u32 %s96, 1
        %s182 = scalar_lea.sflag [#allocation4], %s181
        %s183 = sand.u32 %s96, 1
        %s184 = smul.addr %s183, 8
        %s185 = scalar_lea.vmem [#allocation5], %s184
        %v186 = vld [vmem:[%s1] sm:$0xff]
        %v187 = vld [vmem:[%s163] sm:$0xff]
        %v188 = vld [vmem:[%s2] sm:$0xff]
        %190 = vset.pattern.permute.xlu0 0
        %191 = vperm.xlu0 %190, %v188
        %v192 = vpop.permute.xlu0 %191
        %vm194 = vcmask 64512
        %v196 = vsel %vm194, %v186, 0
        %198 = vmatprep.subr.mxu0 0.0
        %199 = vmatpush1.msra.mxu0 %v187
        %200 = vmatprep.subr.mxu0 0.0
        %201 = vmatpush1.msra.mxu0 0.0
        %202 = vmatprep.subr.mxu0 0.0
        %203 = vmatpush1.msra.mxu0 0.0
        %204 = vmatprep.subr.mxu0 0.0
        %205 = vmatpush1.msra.mxu0 0.0
        %206 = vmatprep.subr.mxu0 0.0
        %207 = vmatpush1.msra.mxu0 0.0
        %208 = vmatprep.subr.mxu0 0.0
        %209 = vmatpush1.msra.mxu0 0.0
        %210 = vmatprep.subr.mxu0 0.0
        %211 = vmatpush1.msra.mxu0 0.0
        %212 = vmatprep.subr.mxu0 0.0
        %213 = vmatpush1.msra.mxu0 0.0
        %214 = vmatprep.subr.mxu0 0.0
        %215 = vmatpush1.msra.mxu0 0.0
        %216 = vmatprep.subr.mxu0 0.0
        %217 = vmatpush1.msra.mxu0 0.0
        %218 = vmatprep.subr.mxu0 0.0
        %219 = vmatpush1.msra.mxu0 0.0
        %220 = vmatprep.subr.mxu0 0.0
        %221 = vmatpush1.msra.mxu0 0.0
        %222 = vmatprep.subr.mxu0 0.0
        %223 = vmatpush1.msra.mxu0 0.0
        %224 = vmatprep.subr.mxu0 0.0
        %225 = vmatpush1.msra.mxu0 0.0
        %226 = vmatprep.subr.mxu0 0.0
        %227 = vmatpush1.msra.mxu0 0.0
        %228 = vmatprep.subr.mxu0 0.0
        %229 = vmatpush1.msra.mxu0 0.0
        %230 = vmatprep.subr.mxu0 0.0
        %231 = vmatpush1.msra.mxu0 0.0
        %232 = vmatprep.subr.mxu0 0.0
        %233 = vmatpush1.msra.mxu0 0.0
        %234 = vmatprep.subr.mxu0 0.0
        %235 = vmatpush1.msra.mxu0 0.0
        %236 = vmatprep.subr.mxu0 0.0
        %237 = vmatpush1.msra.mxu0 0.0
        %238 = vmatprep.subr.mxu0 0.0
        %239 = vmatpush1.msra.mxu0 0.0
        %240 = vmatprep.subr.mxu0 0.0
        %241 = vmatpush1.msra.mxu0 0.0
        %242 = vmatprep.subr.mxu0 0.0
        %243 = vmatpush1.msra.mxu0 0.0
        %244 = vmatprep.subr.mxu0 0.0
        %245 = vmatpush1.msra.mxu0 0.0
        %246 = vmatprep.subr.mxu0 0.0
        %247 = vmatpush1.msra.mxu0 0.0
        %248 = vmatprep.subr.mxu0 0.0
        %249 = vmatpush1.msra.mxu0 0.0
        %250 = vmatprep.subr.mxu0 0.0
        %251 = vmatpush1.msra.mxu0 0.0
        %252 = vmatprep.subr.mxu0 0.0
        %253 = vmatpush1.msra.mxu0 0.0
        %254 = vmatprep.subr.mxu0 0.0
        %255 = vmatpush1.msra.mxu0 0.0
        %256 = vmatprep.subr.mxu0 0.0
        %257 = vmatpush1.msra.mxu0 0.0
        %258 = vmatprep.subr.mxu0 0.0
        %259 = vmatpush1.msra.mxu0 0.0
        %260 = vmatprep.subr.mxu0 0.0
        %261 = vmatpush1.msra.mxu0 0.0
        %262 = vmatprep.mubr.f32.mxu0 0.0
        %263 = vmatmul.mubr.f32.gmra.mrb[0].mxu0 %v196
        %v264 = vpop.f32.mrb[0].mxu0
        %v265 = vadd.f32 %v192, %v264
        %v266 = vpop.f32.mrb[0].mxu0
        %267 = vdwg.mxu0
        %vm268 = vcmask 261120
        %269 = vst.msk [vmem:[%s185] sm:$0xff] %vm268, %v265
        %s270 = sand.u32 %s96, 1
        %s271 = scalar_lea.sflag [#allocation4], %s270
        %s272 = sand.u32 %s96, 1
        %s273 = smul.addr %s272, 8
        %s274 = scalar_lea.vmem [#allocation5], %s273
        // Predicated region
        $region37: #{tpu_custom_call.1} parent=31 // pred_check
          %p275 = pneg %p106
        $region38: #{tpu_custom_call.1} parent=31 // pred_check_branch
          %277 = sbr.rel (%p275) target = $region40
        $region39: #{tpu_custom_call.1} parent=31 // pred_region
          %s279 = ssub.s32 128, 128
          %280 = vsyncadd %s271, %s279
          %s281 = smul.addr %s20, 128
          %s282 = scalar_lea.hbm %s3, %s281
          %s284 = sshll.u32 %s274, 4
          %s285 = int_to_ptr.vmem [resolvable:$true] %s284
          %287 = dma.vmem_to_hbm [thread:$0]  %s285, 128, %s282, %s271
        $region40: #{tpu_custom_call.1} parent=31 // pred_fallthru
          _
      $region32: #{tpu_custom_call.1} parent=5 // pred_fallthru
        _
      %p288 = scmp.le.s32.totalorder 2, %s15
      // Predicated region
      $region41: #{tpu_custom_call.1} parent=5 // pred_check
        %p289 = pneg %p288
      $region42: #{tpu_custom_call.1} parent=5 // pred_check_branch
        %291 = sbr.rel (%p289) target = $region44
      $region43: #{tpu_custom_call.1} parent=5 // pred_region
        %s292 = ssub.s32 %s15, 2
        // Predicated region
        $region45: #{tpu_custom_call.1} parent=43 // pred_check
          %p293 = pneg %p112
        $region46: #{tpu_custom_call.1} parent=43 // pred_check_branch
          %295 = sbr.rel (%p293) target = $region48
        $region47: #{tpu_custom_call.1} parent=43 // pred_region
          %s296 = sand.u32 %s97, 1
          %s297 = scalar_lea.sflag [#allocation4], %s296
          %s298 = sand.u32 %s97, 1
          %s299 = smul.addr %s298, 8
          %s300 = scalar_lea.vmem [#allocation5], %s299
          %301 = dma.done %s297, 128
        $region48: #{tpu_custom_call.1} parent=43 // pred_fallthru
          _
      $region44: #{tpu_custom_call.1} parent=5 // pred_fallthru
        _
    $region6: #{tpu_custom_call.1} parent=1 // loop_footer
      %s19 = sadd.s32 1, %s15
    $region7: #{tpu_custom_call.1} parent=1 // loop_footer_branch
      %14 = sbr.rel target = $region3
    $region8: #{tpu_custom_call.1} parent=1 // loop_exit
      _
    %302 = vsyncpa [#allocation3], 1
    %s303 = scalar_lea.sflag [#allocation3], 1
    %304 = vsyncpa %s303, 1
    %305 = vsyncpa [#allocation4], 1
    %s306 = scalar_lea.sflag [#allocation4], 1
    %307 = vsyncpa %s306, 1

</llo_original>
